<compile_context>
chip_gen: v7x
topology: tpu7x:2x2x1
jax: 0.10.0
libtpu: 0.0.40
codegen_flags: <defaults>
</compile_context>

<pallas_src>
import functools

import jax
import jax.numpy as jnp
from jax.experimental import pallas as pl
from jax.experimental.pallas import tpu as pltpu


def _conv_bn_relu_pool_kernel(x_ref, w_ref, scale_ref, shift_ref, o_ref, *, Q):
    # x_ref     : (1, 1, 4*Q, K) bf16  im2col rows of this tile, laid out as 4 contiguous
    #                                   pool-quadrant blocks of Q rows each ((h%2, w%2)).
    # w_ref     : (K, cout_p)    bf16  conv weights with taps folded into the K dim
    # scale_ref : (1, cout_p)    f32   gamma / sqrt(var + eps)
    # shift_ref : (1, cout_p)    f32   beta + (conv_bias - mean) * scale
    # o_ref     : (1, Q, cout_p) f32   pooled output rows of this tile
    y = jnp.dot(x_ref[0, 0], w_ref[...], preferred_element_type=jnp.float32)  # one MXU pass
    y = jnp.maximum(y * scale_ref[...] + shift_ref[...], 0.0)                 # bias+BN+ReLU
    # 2x2 / stride-2 max-pool == elementwise max of the four contiguous quadrant blocks.
    pooled = jnp.maximum(jnp.maximum(y[0 * Q:1 * Q], y[1 * Q:2 * Q]),
                         jnp.maximum(y[2 * Q:3 * Q], y[3 * Q:4 * Q]))
    o_ref[0] = pooled.astype(o_ref.dtype)                                     # lane-dense store


def _round_up(x, m):
    return (x + m - 1) // m * m


def _tpu_vmem_capacity_bytes():
    # Conservative default (v7x per-TensorCore VMEM) if the query is unavailable.
    try:
        return int(pltpu.get_tpu_info().vmem_capacity_bytes)
    except Exception:
        return 64 * 1024 * 1024


def _pick_pool_rows_per_tile(h2, w2, k_pad, cout_p, budget_bytes, prefer_multiple_tiles):
    """Largest divisor TRP of h2 whose per-tile VMEM footprint fits the budget.

    Q = TRP*W2 must be a multiple of 8 whenever the output is actually tiled (BlockSpec
    sublane rule); a single tile (TRP == h2) is always legal.
    """
    def footprint(trp):
        q = trp * w2
        return (2 * (4 * q) * k_pad * 2      # double-buffered bf16 im2col tile
                + 2 * q * cout_p * 4         # double-buffered f32 output tile
                + (4 * q) * cout_p * 4       # f32 matmul-result slab
                + k_pad * cout_p * 2)        # (single-buffered) bf16 weights

    valid = [t for t in range(1, h2 + 1)
             if h2 % t == 0 and (h2 // t == 1 or (t * w2) % 8 == 0)]
    in_budget = [t for t in valid if footprint(t) <= budget_bytes]
    if prefer_multiple_tiles:
        multi = [t for t in in_budget if h2 // t >= 2]
        if multi:
            return max(multi)
    if in_budget:
        return max(in_budget)
    return min(valid, key=footprint)         # `valid` always contains h2


def conv_module_forward(x_nchw, w_oihw, bias, gamma, beta, run_mean, run_var,
                        padding=1, eps=1e-5):
    N, Cin, H, W = x_nchw.shape
    Cout, _, KH, KW = w_oihw.shape
    Hc = H + 2 * padding - KH + 1            # stride-1 conv output height
    Wc = W + 2 * padding - KW + 1
    H2, W2 = Hc // 2, Wc // 2                # 2x2 max-pool, floor mode (PyTorch default)
    assert H2 >= 1 and W2 >= 1

    # Lane-dense output channels: 128, or 256 when Cout > 128 (v6e/v7x MXU is 256 wide).
    # TODO(synk): keep 128-multiples on v5e for Cout > 128 once the MXU width is queryable.
    cout_mult = 128 if Cout <= 128 else 256
    cout_p = _round_up(Cout, cout_mult)

    k_raw = KH * KW * Cin                    # folded contraction dim (taps x Cin)
    k_pad = _round_up(k_raw, 8)

    # ---- generation-aware tiling knobs ----
    vmem_cap = _tpu_vmem_capacity_bytes()
    small_vmem = vmem_cap <= 64 * 1024 * 1024            # v7x-class: 64 MiB VMEM, 2 TCs
    slab_budget = (4 if small_vmem else 8) * 1024 * 1024
    vmem_limit = (40 if small_vmem else 64) * 1024 * 1024
    min_steps = 4 if small_vmem else 2                    # keep both v7x TCs fed
    TRP = _pick_pool_rows_per_tile(H2, W2, k_pad, cout_p, slab_budget,
                                   prefer_multiple_tiles=N < min_steps)
    n_tiles = H2 // TRP
    Q = TRP * W2                              # pooled rows per grid step (flattened)
    m_tile = 4 * Q                            # conv output rows per grid step (flattened)

    # ---- glue (plain JAX): im2col with pool-quadrant row ordering ----
    x = jnp.transpose(x_nchw, (0, 2, 3, 1)).astype(jnp.float32)            # NHWC
    xp = jnp.pad(x, ((0, 0), (padding, padding), (padding, padding), (0, 0)))
    # One slice per tap, restricted to the exact region the floor-mode pool consumes.
    taps = [xp[:, kh:kh + 2 * H2, kw:kw + 2 * W2, :]
            for kh in range(KH) for kw in range(KW)]
    pat = jnp.concatenate(taps, axis=-1)                                   # (N, 2H2, 2W2, k_raw)
    pat = jnp.pad(pat, ((0, 0), (0, 0), (0, 0), (0, k_pad - k_raw)))
    # Reorder conv positions to (tile, h-parity, w-parity, row-in-tile, pooled-col) so the
    # 2x2 pool inside the kernel is a max over four contiguous row blocks.
    pat = pat.reshape(N, n_tiles, TRP, 2, W2, 2, k_pad)    # (n, t, i, hp, w2, wp, k)
    pat = pat.transpose(0, 1, 3, 5, 2, 4, 6)               # (n, t, hp, wp, i, w2, k)
    pat = pat.reshape(N, n_tiles, m_tile, k_pad).astype(jnp.bfloat16)

    w_flat = jnp.transpose(w_oihw, (2, 3, 1, 0)).reshape(k_raw, Cout)      # [(kh,kw,ci), co]
    w_flat = jnp.pad(w_flat, ((0, k_pad - k_raw), (0, cout_p - Cout))).astype(jnp.bfloat16)

    scale = (gamma / jnp.sqrt(run_var + eps)).astype(jnp.float32)
    shift = (beta + (bias - run_mean) * scale).astype(jnp.float32)
    scale = jnp.pad(scale, (0, cout_p - Cout)).reshape(1, cout_p)
    shift = jnp.pad(shift, (0, cout_p - Cout)).reshape(1, cout_p)

    kernel = functools.partial(_conv_bn_relu_pool_kernel, Q=Q)

    def build_call(single_buffer_consts):
        const_kw = ({"pipeline_mode": pl.Buffered(1)} if single_buffer_consts else {})
        return pl.pallas_call(
            kernel,
            out_shape=jax.ShapeDtypeStruct((N, H2 * W2, cout_p), jnp.float32),
            grid_spec=pltpu.PrefetchScalarGridSpec(
                num_scalar_prefetch=0,
                grid=(N, n_tiles),
                in_specs=[
                    pl.BlockSpec((1, 1, m_tile, k_pad), lambda n, t: (n, t, 0, 0)),
                    pl.BlockSpec((k_pad, cout_p), lambda n, t: (0, 0), **const_kw),
                    pl.BlockSpec((1, cout_p), lambda n, t: (0, 0), **const_kw),
                    pl.BlockSpec((1, cout_p), lambda n, t: (0, 0), **const_kw),
                ],
                out_specs=pl.BlockSpec((1, Q, cout_p), lambda n, t: (n, t, 0)),
            ),
            compiler_params=pltpu.CompilerParams(
                dimension_semantics=("parallel", "parallel"),
                vmem_limit_bytes=vmem_limit,
            ),
        )

    try:
        out_flat = build_call(True)(pat, w_flat, scale, shift)
    except Exception:
        # Fallback for jax versions where pipeline_mode=pl.Buffered(1) is rejected on TPU;
        # constants are still fetched only once thanks to the constant index_maps.
        out_flat = build_call(False)(pat, w_flat, scale, shift)

    out = out_flat[..., :Cout].reshape(N, H2, W2, Cout)        # drop lane padding
    return jnp.transpose(out, (0, 3, 1, 2)).astype(jnp.float32)  # back to NCHW


def reference_forward(x, w, b, gamma, beta, mean, var, eps=1e-5):
    y = jax.lax.conv_general_dilated(
        x, w, window_strides=(1, 1), padding=((1, 1), (1, 1)),
        dimension_numbers=("NCHW", "OIHW", "NCHW"))
    y = y + b[None, :, None, None]
    s = gamma / jnp.sqrt(var + eps)
    y = (y - mean[None, :, None, None]) * s[None, :, None, None] + beta[None, :, None, None]
    y = jnp.maximum(y, 0.0)
    y = jax.lax.reduce_window(y, -jnp.inf, jax.lax.max,
                              (1, 1, 2, 2), (1, 1, 2, 2), "VALID")
    return y


if __name__ == "__main__":
    N, Cin, H, W = 2, 4, 16, 16
    Cout, K = 8, 3

    key = jax.random.PRNGKey(0)
    k1, k2, k3, k4, k5, k6, k7 = jax.random.split(key, 7)
    x = jax.random.normal(k1, (N, Cin, H, W), dtype=jnp.float32)
    w = 0.1 * jax.random.normal(k2, (Cout, Cin, K, K), dtype=jnp.float32)
    b = 0.1 * jax.random.normal(k3, (Cout,), dtype=jnp.float32)
    gamma = 1.0 + 0.1 * jax.random.normal(k4, (Cout,), dtype=jnp.float32)
    beta = 0.1 * jax.random.normal(k5, (Cout,), dtype=jnp.float32)
    run_mean = 0.1 * jax.random.normal(k6, (Cout,), dtype=jnp.float32)
    run_var = jax.random.uniform(k7, (Cout,), minval=0.5, maxval=1.5, dtype=jnp.float32)

    out = conv_module_forward(x, w, b, gamma, beta, run_mean, run_var)
    out = jax.block_until_ready(out)

    # Reference on bf16-rounded conv operands (the kernel feeds the MXU bf16), so the only
    # remaining difference is f32 accumulation order.
    xq = x.astype(jnp.bfloat16).astype(jnp.float32)
    wq = w.astype(jnp.bfloat16).astype(jnp.float32)
    ref = reference_forward(xq, wq, b, gamma, beta, run_mean, run_var)

    assert out.shape == (N, Cout, H // 2, W // 2), out.shape
    err = float(jnp.max(jnp.abs(out - ref)))
    assert jnp.allclose(out, ref, atol=2e-3, rtol=2e-3), err

    print("KERNEL_OK")
</pallas_src>

<mosaic_0001>
module attributes {stable_mosaic.version = 11 : i64} {
  func.func @_conv_bn_relu_pool_kernel(%arg0: i32, %arg1: i32, %arg2: memref<1x1x128x40xbf16, #tpu.memory_space<vmem>>, %arg3: memref<40x128xbf16, #tpu.memory_space<vmem>>, %arg4: memref<1x128xf32, #tpu.memory_space<vmem>>, %arg5: memref<1x128xf32, #tpu.memory_space<vmem>>, %arg6: memref<1x32x128xf32, #tpu.memory_space<vmem>>) attributes {dimension_semantics = [#tpu.dimension_semantics<parallel>, #tpu.dimension_semantics<parallel>], iteration_bounds = array<i64: 2, 2>, scalar_prefetch = 0 : i64, scratch_operands = 0 : i64, tpu.core_type = #tpu.core_type<tc>, window_params = [{transform_indices = @transform_0, window_bounds = array<i64: 1, 1, 128, 40>}, {pipeline_mode = #tpu.pipeline_mode<synchronous>, transform_indices = @transform_1, window_bounds = array<i64: 40, 128>}, {pipeline_mode = #tpu.pipeline_mode<synchronous>, transform_indices = @transform_2, window_bounds = array<i64: 1, 128>}, {pipeline_mode = #tpu.pipeline_mode<synchronous>, transform_indices = @transform_3, window_bounds = array<i64: 1, 128>}, {transform_indices = @transform_4, window_bounds = array<i64: 1, 32, 128>}]} {
    %c0 = arith.constant 0 : index
    %c0_0 = arith.constant 0 : index
    %c0_1 = arith.constant 0 : index
    %c0_2 = arith.constant 0 : index
    %0 = vector.load %arg2[%c0, %c0_0, %c0_1, %c0_2] : memref<1x1x128x40xbf16, #tpu.memory_space<vmem>>, vector<1x1x128x40xbf16>
    %1 = vector.shape_cast %0 : vector<1x1x128x40xbf16> to vector<128x40xbf16>
    %c0_3 = arith.constant 0 : index
    %c0_4 = arith.constant 0 : index
    %2 = vector.load %arg3[%c0_3, %c0_4] : memref<40x128xbf16, #tpu.memory_space<vmem>>, vector<40x128xbf16>
    %cst = arith.constant dense<0.000000e+00> : vector<128x128xf32>
    %3 = tpu.matmul %1, %2, %cst {dimension_numbers = #tpu.dot_dimension_numbers<[1], [0], [0], [1], [0, 0, 1, 1], [], []>} : vector<128x40xbf16>, vector<40x128xbf16>, vector<128x128xf32> -> vector<128x128xf32>
    %c0_5 = arith.constant 0 : index
    %c0_6 = arith.constant 0 : index
    %4 = vector.load %arg4[%c0_5, %c0_6] : memref<1x128xf32, #tpu.memory_space<vmem>>, vector<1x128xf32>
    %5 = vector.broadcast %4 : vector<1x128xf32> to vector<128x128xf32>
    %6 = arith.mulf %3, %5 : vector<128x128xf32>
    %c0_7 = arith.constant 0 : index
    %c0_8 = arith.constant 0 : index
    %7 = vector.load %arg5[%c0_7, %c0_8] : memref<1x128xf32, #tpu.memory_space<vmem>>, vector<1x128xf32>
    %8 = vector.broadcast %7 : vector<1x128xf32> to vector<128x128xf32>
    %9 = arith.addf %6, %8 : vector<128x128xf32>
    %cst_9 = arith.constant 0.000000e+00 : f32
    %10 = vector.broadcast %cst_9 : f32 to vector<128x128xf32>
    %11 = arith.maximumf %9, %10 : vector<128x128xf32>
    %12 = vector.extract_strided_slice %11 {offsets = [0, 0], sizes = [32, 128], strides = [1, 1]} : vector<128x128xf32> to vector<32x128xf32>
    %13 = vector.extract_strided_slice %11 {offsets = [32, 0], sizes = [32, 128], strides = [1, 1]} : vector<128x128xf32> to vector<32x128xf32>
    %14 = arith.maximumf %12, %13 : vector<32x128xf32>
    %15 = vector.extract_strided_slice %11 {offsets = [64, 0], sizes = [32, 128], strides = [1, 1]} : vector<128x128xf32> to vector<32x128xf32>
    %16 = vector.extract_strided_slice %11 {offsets = [96, 0], sizes = [32, 128], strides = [1, 1]} : vector<128x128xf32> to vector<32x128xf32>
    %17 = arith.maximumf %15, %16 : vector<32x128xf32>
    %18 = arith.maximumf %14, %17 : vector<32x128xf32>
    %c0_10 = arith.constant 0 : index
    %c0_11 = arith.constant 0 : index
    %c0_12 = arith.constant 0 : index
    %19 = vector.load %arg6[%c0_10, %c0_11, %c0_12] : memref<1x32x128xf32, #tpu.memory_space<vmem>>, vector<1x32x128xf32>
    %20 = vector.shape_cast %19 : vector<1x32x128xf32> to vector<32x128xf32>
    %21 = vector.shape_cast %18 : vector<32x128xf32> to vector<1x32x128xf32>
    tpu.vector_store %arg6[%c0_10, %c0_11, %c0_12], %21 {strides = array<i32>} : memref<1x32x128xf32, #tpu.memory_space<vmem>>, vector<1x32x128xf32>,
    return
  }
  func.func @transform_0(%arg0: i32, %arg1: i32) -> (i32, i32, i32, i32) {
    %c0_i32 = arith.constant 0 : i32
    %c0_i32_0 = arith.constant 0 : i32
    %c0_i32_1 = arith.constant 0 : i32
    return %arg0, %arg1, %c0_i32, %c0_i32_0 : i32, i32, i32, i32
  }
  func.func @transform_1(%arg0: i32, %arg1: i32) -> (i32, i32) {
    %c0_i32 = arith.constant 0 : i32
    %c0_i32_0 = arith.constant 0 : i32
    %c0_i32_1 = arith.constant 0 : i32
    return %c0_i32, %c0_i32_0 : i32, i32
  }
  func.func @transform_2(%arg0: i32, %arg1: i32) -> (i32, i32) {
    %c0_i32 = arith.constant 0 : i32
    %c0_i32_0 = arith.constant 0 : i32
    %c0_i32_1 = arith.constant 0 : i32
    return %c0_i32, %c0_i32_0 : i32, i32
  }
  func.func @transform_3(%arg0: i32, %arg1: i32) -> (i32, i32) {
    %c0_i32 = arith.constant 0 : i32
    %c0_i32_0 = arith.constant 0 : i32
    %c0_i32_1 = arith.constant 0 : i32
    return %c0_i32, %c0_i32_0 : i32, i32
  }
  func.func @transform_4(%arg0: i32, %arg1: i32) -> (i32, i32, i32) {
    %c0_i32 = arith.constant 0 : i32
    %c0_i32_0 = arith.constant 0 : i32
    return %arg0, %arg1, %c0_i32 : i32, i32, i32
  }
}

module attributes {stable_mosaic.version = 11 : i64} {
  func.func @_conv_bn_relu_pool_kernel(%arg0: i32, %arg1: i32, %arg2: memref<1x1x128x40xbf16, #tpu.memory_space<vmem>>, %arg3: memref<40x128xbf16, #tpu.memory_space<vmem>>, %arg4: memref<1x128xf32, #tpu.memory_space<vmem>>, %arg5: memref<1x128xf32, #tpu.memory_space<vmem>>, %arg6: memref<1x32x128xf32, #tpu.memory_space<vmem>>) attributes {dimension_semantics = [#tpu.dimension_semantics<parallel>, #tpu.dimension_semantics<parallel>], iteration_bounds = array<i64: 2, 2>, scalar_prefetch = 0 : i64, scratch_operands = 0 : i64, tpu.core_type = #tpu.core_type<tc>, window_params = [{transform_indices = @transform_0, window_bounds = array<i64: 1, 1, 128, 40>}, {pipeline_mode = #tpu.pipeline_mode<synchronous>, transform_indices = @transform_1, window_bounds = array<i64: 40, 128>}, {pipeline_mode = #tpu.pipeline_mode<synchronous>, transform_indices = @transform_2, window_bounds = array<i64: 1, 128>}, {pipeline_mode = #tpu.pipeline_mode<synchronous>, transform_indices = @transform_3, window_bounds = array<i64: 1, 128>}, {transform_indices = @transform_4, window_bounds = array<i64: 1, 32, 128>}]} {
    %c0 = arith.constant 0 : index
    %c0_0 = arith.constant 0 : index
    %c0_1 = arith.constant 0 : index
    %c0_2 = arith.constant 0 : index
    %0 = vector.load %arg2[%c0, %c0_0, %c0_1, %c0_2] : memref<1x1x128x40xbf16, #tpu.memory_space<vmem>>, vector<1x1x128x40xbf16>
    %1 = vector.shape_cast %0 : vector<1x1x128x40xbf16> to vector<128x40xbf16>
    %c0_3 = arith.constant 0 : index
    %c0_4 = arith.constant 0 : index
    %2 = vector.load %arg3[%c0_3, %c0_4] : memref<40x128xbf16, #tpu.memory_space<vmem>>, vector<40x128xbf16>
    %cst = arith.constant dense<0.000000e+00> : vector<128x128xf32>
    %3 = tpu.matmul %1, %2, %cst {dimension_numbers = #tpu.dot_dimension_numbers<[1], [0], [0], [1], [0, 0, 1, 1], [], []>} : vector<128x40xbf16>, vector<40x128xbf16>, vector<128x128xf32> -> vector<128x128xf32>
    %c0_5 = arith.constant 0 : index
    %c0_6 = arith.constant 0 : index
    %4 = vector.load %arg4[%c0_5, %c0_6] : memref<1x128xf32, #tpu.memory_space<vmem>>, vector<1x128xf32>
    %5 = vector.broadcast %4 : vector<1x128xf32> to vector<128x128xf32>
    %6 = arith.mulf %3, %5 : vector<128x128xf32>
    %c0_7 = arith.constant 0 : index
    %c0_8 = arith.constant 0 : index
    %7 = vector.load %arg5[%c0_7, %c0_8] : memref<1x128xf32, #tpu.memory_space<vmem>>, vector<1x128xf32>
    %8 = vector.broadcast %7 : vector<1x128xf32> to vector<128x128xf32>
    %9 = arith.addf %6, %8 : vector<128x128xf32>
    %cst_9 = arith.constant 0.000000e+00 : f32
    %10 = vector.broadcast %cst_9 : f32 to vector<128x128xf32>
    %11 = arith.maximumf %9, %10 : vector<128x128xf32>
    %12 = vector.extract_strided_slice %11 {offsets = [0, 0], sizes = [32, 128], strides = [1, 1]} : vector<128x128xf32> to vector<32x128xf32>
    %13 = vector.extract_strided_slice %11 {offsets = [32, 0], sizes = [32, 128], strides = [1, 1]} : vector<128x128xf32> to vector<32x128xf32>
    %14 = arith.maximumf %12, %13 : vector<32x128xf32>
    %15 = vector.extract_strided_slice %11 {offsets = [64, 0], sizes = [32, 128], strides = [1, 1]} : vector<128x128xf32> to vector<32x128xf32>
    %16 = vector.extract_strided_slice %11 {offsets = [96, 0], sizes = [32, 128], strides = [1, 1]} : vector<128x128xf32> to vector<32x128xf32>
    %17 = arith.maximumf %15, %16 : vector<32x128xf32>
    %18 = arith.maximumf %14, %17 : vector<32x128xf32>
    %c0_10 = arith.constant 0 : index
    %c0_11 = arith.constant 0 : index
    %c0_12 = arith.constant 0 : index
    %19 = vector.load %arg6[%c0_10, %c0_11, %c0_12] : memref<1x32x128xf32, #tpu.memory_space<vmem>>, vector<1x32x128xf32>
    %20 = vector.shape_cast %19 : vector<1x32x128xf32> to vector<32x128xf32>
    %21 = vector.shape_cast %18 : vector<32x128xf32> to vector<1x32x128xf32>
    tpu.vector_store %arg6[%c0_10, %c0_11, %c0_12], %21 {strides = array<i32>} : memref<1x32x128xf32, #tpu.memory_space<vmem>>, vector<1x32x128xf32>,
    return
  }
  func.func @transform_0(%arg0: i32, %arg1: i32) -> (i32, i32, i32, i32) {
    %c0_i32 = arith.constant 0 : i32
    %c0_i32_0 = arith.constant 0 : i32
    %c0_i32_1 = arith.constant 0 : i32
    return %arg0, %arg1, %c0_i32, %c0_i32_0 : i32, i32, i32, i32
  }
  func.func @transform_1(%arg0: i32, %arg1: i32) -> (i32, i32) {
    %c0_i32 = arith.constant 0 : i32
    %c0_i32_0 = arith.constant 0 : i32
    %c0_i32_1 = arith.constant 0 : i32
    return %c0_i32, %c0_i32_0 : i32, i32
  }
  func.func @transform_2(%arg0: i32, %arg1: i32) -> (i32, i32) {
    %c0_i32 = arith.constant 0 : i32
    %c0_i32_0 = arith.constant 0 : i32
    %c0_i32_1 = arith.constant 0 : i32
    return %c0_i32, %c0_i32_0 : i32, i32
  }
  func.func @transform_3(%arg0: i32, %arg1: i32) -> (i32, i32) {
    %c0_i32 = arith.constant 0 : i32
    %c0_i32_0 = arith.constant 0 : i32
    %c0_i32_1 = arith.constant 0 : i32
    return %c0_i32, %c0_i32_0 : i32, i32
  }
  func.func @transform_4(%arg0: i32, %arg1: i32) -> (i32, i32, i32) {
    %c0_i32 = arith.constant 0 : i32
    %c0_i32_0 = arith.constant 0 : i32
    return %arg0, %arg1, %c0_i32 : i32, i32, i32
  }
}

</mosaic_0001>

<llo_original>
// kernel: tpu_custom_call.1
$region0: #{tpu_custom_call.1}
  #allocation0 [shape = 'u32[]', space=smem, size = 0x4, offset = 0x4, fixed_abs, tag = 'smem constant byte address 0x4 - core index']
  #allocation1 [shape = 'u32[144,128]{1,0:T(1,128)}', space=vmem, size = 0x12000, scoped, tag = 'internal scratch']
  %s0 = inlined_call_operand.vmem [shape: bf16[2,2,128,40], index: 0, kind: input, shape index: {}]
  %s1 = inlined_call_operand.vmem [shape: bf16[40,128], index: 1, kind: input, shape index: {}]
  %s2 = inlined_call_operand.vmem [shape: f32[1,128], index: 2, kind: input, shape index: {}]
  %s3 = inlined_call_operand.vmem [shape: f32[1,128], index: 3, kind: input, shape index: {}]
  %s4 = inlined_call_operand.hbm [shape: f32[2,64,128], index: 4, kind: output, shape index: {}]
  %s5 = sld [smem:[#allocation0]]
  $region49: #{tpu_custom_call.1} parent=0
    _
  %s7 = ssub.s32 1, %s5
  %s8 = scalar_select 0, %s7, %s5
  $region1: #{tpu_custom_call.1} parent=0
    #allocation2 [shape = 'u8[32768]{0}', space=vmem, size = 0x8000, scoped, tag = 'output window, operand 0']
    #allocation3 [shape = 's32[2]{0}', space=sflag, size = 0x8, scoped, tag = 'scoped memory for tpu_custom_call.1']
    %9 = vsyncpa [#allocation3], 0
    %s10 = scalar_lea.sflag [#allocation3], 1
    %11 = vsyncpa %s10, 0
    loop: start=0, step=1, limit=6
    $region2: #{tpu_custom_call.1} parent=1 // loop_pre_header
      _
    $region3: #{tpu_custom_call.1} parent=1 // loop_header
      %s13 = sphi 0, %s17
      %p14 = scmp.ge.s32.totalorder %s13, 6
      %s20 = sphi 0, %s32
      %s21 = sphi 0, %s28
      %s22 = sphi 0, %s20
      %s23 = sphi 0, %s21
      %s24 = sphi 0, %s22
      %s25 = sphi 0, %s23
      %s37 = sphi 0, %s39
      %s40 = sphi 0, %s37
      %s41 = sphi 0, %s40
      %s57 = sphi 0, %s41
      %s61 = sphi 0, %s61
      %s63 = sphi 0, %s61
      %s64 = sphi 0, %s63
      %s78 = sphi 0, %s64
      %s82 = sphi 0, %s82
      %s84 = sphi 0, %s82
      %s85 = sphi 0, %s84
      %s99 = sphi 0, %s85
      %s103 = sphi 0, %s103
      %s105 = sphi 0, %s103
      %s106 = sphi 0, %s105
      %s120 = sphi 0, %s106
      %s128 = sphi 0, %s130
      %s131 = sphi 0, %s128
      %s132 = sphi 0, %s131
      %s148 = sphi 0, %s132
    $region4: #{tpu_custom_call.1} parent=1 // loop_header_branch
      %16 = sbr.rel (%p14) target = $region8
    $region5: #{tpu_custom_call.1} parent=1 // loop_body
      %s18 = ssub.s32 %s13, 1
      %s19 = ssub.s32 %s13, 2
      %s26 = sadd.s32 1, %s21
      %p27 = scmp.ge.s32.totalorder %s26, 2
      %s28 = scalar_select %p27, 0, %s26
      %s29 = sadd.s32 1, %s20
      %s30 = scalar_select %p27, %s29, %s20
      %p31 = scmp.ge.s32.totalorder %s30, 2
      %s32 = scalar_select %p31, 0, %s30
      %s33 = ssub.s32 %s20, %s32
      %s34 = ssub.s32 %s21, %s28
      %s35 = sor.u32 %s33, %s34
      %p36 = scmp.eq.s32.totalorder %s35, 0
      %s38 = sadd.s32 %s37, 1
      %s39 = scalar_select %p36, %s37, %s38
      %p42 = pneg %p36
      %p43 = scmp.eq.s32.totalorder %s13, 3
      %p44 = por %p42, %p43
      %p45 = scmp.ne.s32.totalorder %s37, %s40
      %p46 = scmp.eq.s32.totalorder %s13, 0
      %p47 = por %p45, %p46
      %p48 = scmp.ne.s32.totalorder %s37, %s40
      %p49 = scmp.eq.s32.totalorder %s18, 3
      %p50 = por %p48, %p49
      %p51 = scmp.ne.s32.totalorder %s40, %s41
      %p52 = scmp.eq.s32.totalorder %s18, 0
      %p53 = por %p51, %p52
      %p54 = scmp.ne.s32.totalorder %s40, %s41
      %p55 = scmp.eq.s32.totalorder %s19, 3
      %p56 = por %p54, %p55
      %p58 = scmp.ne.s32.totalorder %s41, %s57
      %p59 = scmp.eq.s32.totalorder %s19, 0
      %p60 = por %p58, %p59
      %s62 = sadd.s32 %s61, 1
      %p65 = scmp.eq.s32.totalorder %s13, 3
      %p66 = scmp.ne.s32.totalorder %s61, %s63
      %p67 = scmp.eq.s32.totalorder %s13, 0
      %p68 = por %p66, %p67
      %p69 = scmp.ne.s32.totalorder %s61, %s63
      %p70 = scmp.eq.s32.totalorder %s18, 3
      %p71 = por %p69, %p70
      %p72 = scmp.ne.s32.totalorder %s63, %s64
      %p73 = scmp.eq.s32.totalorder %s18, 0
      %p74 = por %p72, %p73
      %p75 = scmp.ne.s32.totalorder %s63, %s64
      %p76 = scmp.eq.s32.totalorder %s19, 3
      %p77 = por %p75, %p76
      %p79 = scmp.ne.s32.totalorder %s64, %s78
      %p80 = scmp.eq.s32.totalorder %s19, 0
      %p81 = por %p79, %p80
      %s83 = sadd.s32 %s82, 1
      %p86 = scmp.eq.s32.totalorder %s13, 3
      %p87 = scmp.ne.s32.totalorder %s82, %s84
      %p88 = scmp.eq.s32.totalorder %s13, 0
      %p89 = por %p87, %p88
      %p90 = scmp.ne.s32.totalorder %s82, %s84
      %p91 = scmp.eq.s32.totalorder %s18, 3
      %p92 = por %p90, %p91
      %p93 = scmp.ne.s32.totalorder %s84, %s85
      %p94 = scmp.eq.s32.totalorder %s18, 0
      %p95 = por %p93, %p94
      %p96 = scmp.ne.s32.totalorder %s84, %s85
      %p97 = scmp.eq.s32.totalorder %s19, 3
      %p98 = por %p96, %p97
      %p100 = scmp.ne.s32.totalorder %s85, %s99
      %p101 = scmp.eq.s32.totalorder %s19, 0
      %p102 = por %p100, %p101
      %s104 = sadd.s32 %s103, 1
      %p107 = scmp.eq.s32.totalorder %s13, 3
      %p108 = scmp.ne.s32.totalorder %s103, %s105
      %p109 = scmp.eq.s32.totalorder %s13, 0
      %p110 = por %p108, %p109
      %p111 = scmp.ne.s32.totalorder %s103, %s105
      %p112 = scmp.eq.s32.totalorder %s18, 3
      %p113 = por %p111, %p112
      %p114 = scmp.ne.s32.totalorder %s105, %s106
      %p115 = scmp.eq.s32.totalorder %s18, 0
      %p116 = por %p114, %p115
      %p117 = scmp.ne.s32.totalorder %s105, %s106
      %p118 = scmp.eq.s32.totalorder %s19, 3
      %p119 = por %p117, %p118
      %p121 = scmp.ne.s32.totalorder %s106, %s120
      %p122 = scmp.eq.s32.totalorder %s19, 0
      %p123 = por %p121, %p122
      %s124 = ssub.s32 %s20, %s32
      %s125 = ssub.s32 %s21, %s28
      %s126 = sor.u32 %s124, %s125
      %p127 = scmp.eq.s32.totalorder %s126, 0
      %s129 = sadd.s32 %s128, 1
      %s130 = scalar_select %p127, %s128, %s129
      %p133 = pneg %p127
      %p134 = scmp.eq.s32.totalorder %s13, 3
      %p135 = por %p133, %p134
      %p136 = scmp.ne.s32.totalorder %s128, %s131
      %p137 = scmp.eq.s32.totalorder %s13, 0
      %p138 = por %p136, %p137
      %p139 = scmp.ne.s32.totalorder %s128, %s131
      %p140 = scmp.eq.s32.totalorder %s18, 3
      %p141 = por %p139, %p140
      %p142 = scmp.ne.s32.totalorder %s131, %s132
      %p143 = scmp.eq.s32.totalorder %s18, 0
      %p144 = por %p142, %p143
      %p145 = scmp.ne.s32.totalorder %s131, %s132
      %p146 = scmp.eq.s32.totalorder %s19, 3
      %p147 = por %p145, %p146
      %p149 = scmp.ne.s32.totalorder %s132, %s148
      %p150 = scmp.eq.s32.totalorder %s19, 0
      %p151 = por %p149, %p150
      %p152 = scmp.le.s32.totalorder 1, %s13
      %p153 = scmp.lt.s32.totalorder %s13, 5
      %p154 = pnand %p152, %p153
      %p155 = pneg %p154
      // Predicated region
      $region9: #{tpu_custom_call.1} parent=5 // pred_check
        _
      $region10: #{tpu_custom_call.1} parent=5 // pred_check_branch
        %157 = sbr.rel (%p154) target = $region12
      $region11: #{tpu_custom_call.1} parent=5 // pred_region
        %s158 = ssub.s32 %s13, 1
        // Predicated region
        $region13: #{tpu_custom_call.1} parent=11 // pred_check
          %p159 = pneg %p74
        $region14: #{tpu_custom_call.1} parent=11 // pred_check_branch
          %161 = sbr.rel (%p159) target = $region16
        $region15: #{tpu_custom_call.1} parent=11 // pred_region
          _
        $region16: #{tpu_custom_call.1} parent=11 // pred_fallthru
          _
        // Predicated region
        $region17: #{tpu_custom_call.1} parent=11 // pred_check
          %p162 = pneg %p95
        $region18: #{tpu_custom_call.1} parent=11 // pred_check_branch
          %164 = sbr.rel (%p162) target = $region20
        $region19: #{tpu_custom_call.1} parent=11 // pred_region
          _
        $region20: #{tpu_custom_call.1} parent=11 // pred_fallthru
          _
        // Predicated region
        $region21: #{tpu_custom_call.1} parent=11 // pred_check
          %p165 = pneg %p116
        $region22: #{tpu_custom_call.1} parent=11 // pred_check_branch
          %167 = sbr.rel (%p165) target = $region24
        $region23: #{tpu_custom_call.1} parent=11 // pred_region
          _
        $region24: #{tpu_custom_call.1} parent=11 // pred_fallthru
          _
      $region12: #{tpu_custom_call.1} parent=5 // pred_fallthru
        _
      %p168 = scmp.lt.s32.totalorder %s13, 4
      // Predicated region
      $region25: #{tpu_custom_call.1} parent=5 // pred_check
        %p169 = pneg %p168
      $region26: #{tpu_custom_call.1} parent=5 // pred_check_branch
        %171 = sbr.rel (%p169) target = $region28
      $region27: #{tpu_custom_call.1} parent=5 // pred_region
        // Predicated region
        $region29: #{tpu_custom_call.1} parent=27 // pred_check
          %p172 = pneg %p47
        $region30: #{tpu_custom_call.1} parent=27 // pred_check_branch
          %174 = sbr.rel (%p172) target = $region32
        $region31: #{tpu_custom_call.1} parent=27 // pred_region
          %p175 = scmp.lt.s32.totalorder %s20, 1
          %s176 = scalar_select %p175, %s20, 1
          %p177 = scmp.lt.s32.totalorder %s21, 1
          %s178 = scalar_select %p177, %s21, 1
          %s179 = smul.addr %s178, 16
          %s180 = smul.addr %s176, 32
          %s181 = sadd.s32 %s179, %s180
          %s182 = smul.addr %s181, 4
          %s183 = scalar_lea.vmem %s0, %s182
        $region32: #{tpu_custom_call.1} parent=27 // pred_fallthru
          _
      $region28: #{tpu_custom_call.1} parent=5 // pred_fallthru
        _
      %p184 = scmp.le.s32.totalorder 1, %s13
      %p185 = scmp.lt.s32.totalorder %s13, 5
      %p186 = pnand %p184, %p185
      %p187 = pneg %p186
      // Predicated region
      $region33: #{tpu_custom_call.1} parent=5 // pred_check
        _
      $region34: #{tpu_custom_call.1} parent=5 // pred_check_branch
        %189 = sbr.rel (%p186) target = $region36
      $region35: #{tpu_custom_call.1} parent=5 // pred_region
        %s190 = ssub.s32 %s13, 1
        %p191 = scmp.lt.s32.totalorder %s22, 1
        %s192 = scalar_select %p191, %s22, 1
        %p193 = scmp.lt.s32.totalorder %s23, 1
        %s194 = scalar_select %p193, %s23, 1
        %s195 = smul.addr %s194, 16
        %s196 = smul.addr %s192, 32
        %s197 = sadd.s32 %s195, %s196
        %s198 = smul.addr %s197, 4
        %s199 = scalar_lea.vmem %s0, %s198
        %p200 = pneg %p53
        %p201 = pneg %p50
        %p202 = pneg %p74
        %p203 = pneg %p71
        %p204 = pneg %p95
        %p205 = pneg %p92
        %p206 = pneg %p116
        %p207 = pneg %p113
        %p208 = pneg %p144
        %p209 = pneg %p141
        %s210 = sand.u32 %s131, 1
        %s211 = scalar_lea.sflag [#allocation3], %s210
        %s212 = sand.u32 %s131, 1
        %s213 = smul.addr %s212, 32
        %s214 = scalar_lea.vmem [#allocation2], %s213
        %p215 = scmp.lt.s32.totalorder %s22, 1
        %s216 = scalar_select %p215, %s22, 1
        %p217 = scmp.lt.s32.totalorder %s23, 1
        %s218 = scalar_select %p217, %s23, 1
        %s219 = smul.addr %s218, 16
        %s220 = smul.addr %s216, 32
        %s221 = sadd.s32 %s219, %s220
        %s222 = smul.addr %s221, 4
        %s223 = scalar_lea.vmem %s0, %s222
        %s224 = smul.u32 4, %s23
        %v226 = vld [vmem:[%s223] sm:$0xf]
        %v227 = vld [vmem:[%s223 + $0x4] sm:$0xf]
        %v228 = vld [vmem:[%s223 + $0x8] sm:$0xf]
        %v229 = vld [vmem:[%s223 + $0xc] sm:$0xf]
        %v230 = vld [vmem:[%s223 + $0x10] sm:$0xf]
        %v231 = vld [vmem:[%s223 + $0x14] sm:$0xf]
        %v232 = vld [vmem:[%s223 + $0x18] sm:$0xf]
        %v233 = vld [vmem:[%s223 + $0x1c] sm:$0xf]
        %v234 = vld [vmem:[%s223 + $0x20] sm:$0xf]
        %v235 = vld [vmem:[%s223 + $0x24] sm:$0xf]
        %v236 = vld [vmem:[%s223 + $0x28] sm:$0xf]
        %v237 = vld [vmem:[%s223 + $0x2c] sm:$0xf]
        %v238 = vld [vmem:[%s223 + $0x30] sm:$0xf]
        %v239 = vld [vmem:[%s223 + $0x34] sm:$0xf]
        %v240 = vld [vmem:[%s223 + $0x38] sm:$0xf]
        %v241 = vld [vmem:[%s223 + $0x3c] sm:$0xf]
        %v242 = vld [vmem:[%s1] sm:$0xf]
        %v243 = vld [vmem:[%s1 + $0x4] sm:$0xf]
        %v244 = vld [vmem:[%s1 + $0x8] sm:$0xf]
        %v245 = vld [vmem:[%s1 + $0xc] sm:$0xf]
        %v246 = vld [vmem:[%s1 + $0x10] sm:$0xf]
        %v263 = vunpack.c.l.b16 %v226
        %v264 = vunpack.c.l.b16 %v227
        %v265 = vunpack.c.l.b16 %v228
        %v266 = vunpack.c.l.b16 %v229
        %v267 = vunpack.c.l.b16 %v230
        %v268 = vunpack.c.l.b16 %v231
        %v269 = vunpack.c.l.b16 %v232
        %v270 = vunpack.c.l.b16 %v233
        %v271 = vunpack.c.l.b16 %v234
        %v272 = vunpack.c.l.b16 %v235
        %v273 = vunpack.c.l.b16 %v236
        %v274 = vunpack.c.l.b16 %v237
        %v275 = vunpack.c.l.b16 %v238
        %v276 = vunpack.c.l.b16 %v239
        %v277 = vunpack.c.l.b16 %v240
        %v278 = vunpack.c.l.b16 %v241
        %v279 = vpack.c.b16 %v264, %v263
        %v280 = vpack.c.b16 %v266, %v265
        %v281 = vpack.c.b16 %v268, %v267
        %v282 = vpack.c.b16 %v270, %v269
        %v283 = vpack.c.b16 %v272, %v271
        %v284 = vpack.c.b16 %v274, %v273
        %v285 = vpack.c.b16 %v276, %v275
        %v286 = vpack.c.b16 %v278, %v277
        %v292 = vunpack.c.l.b16 %v242
        %v293 = vunpack.c.l.b16 %v243
        %v294 = vunpack.c.l.b16 %v244
        %v295 = vunpack.c.l.b16 %v245
        %v296 = vunpack.c.l.b16 %v246
        %v297 = vpack.c.b16 %v293, %v292
        %v298 = vpack.c.b16 %v295, %v294
        %v299 = vpack.c.b16 %v296, %v296
        %vm302 = vcmask 326656
        %v304 = vsel %vm302, %v279, 0
        %v307 = vsel %vm302, %v280, 0
        %v310 = vsel %vm302, %v281, 0
        %v313 = vsel %vm302, %v282, 0
        %v316 = vsel %vm302, %v283, 0
        %v319 = vsel %vm302, %v284, 0
        %v322 = vsel %vm302, %v285, 0
        %v325 = vsel %vm302, %v286, 0
        %vm327 = vcmask 1043456
        %v329 = vsel %vm327, %v299, 0
        %331 = vmatprep.subr.bf16.mxu0 0
        %332 = vmatpush1.bf16.msra.mxu0 %v297
        %333 = vmatprep.subr.bf16.mxu0 0
        %334 = vmatpush1.bf16.msra.mxu0 %v298
        %335 = vmatprep.subr.bf16.mxu0 0
        %336 = vmatpush1.bf16.msra.mxu0 %v329
        %337 = vmatprep.subr.bf16.mxu0 0
        %338 = vmatpush1.bf16.msra.mxu0 0
        %339 = vmatprep.subr.bf16.mxu0 0
        %340 = vmatpush1.bf16.msra.mxu0 0
        %341 = vmatprep.subr.bf16.mxu0 0
        %342 = vmatpush1.bf16.msra.mxu0 0
        %343 = vmatprep.subr.bf16.mxu0 0
        %344 = vmatpush1.bf16.msra.mxu0 0
        %345 = vmatprep.subr.bf16.mxu0 0
        %346 = vmatpush1.bf16.msra.mxu0 0
        %347 = vmatprep.subr.bf16.mxu0 0
        %348 = vmatpush1.bf16.msra.mxu0 0
        %349 = vmatprep.subr.bf16.mxu0 0
        %350 = vmatpush1.bf16.msra.mxu0 0
        %351 = vmatprep.subr.bf16.mxu0 0
        %352 = vmatpush1.bf16.msra.mxu0 0
        %353 = vmatprep.subr.bf16.mxu0 0
        %354 = vmatpush1.bf16.msra.mxu0 0
        %355 = vmatprep.subr.bf16.mxu0 0
        %356 = vmatpush1.bf16.msra.mxu0 0
        %357 = vmatprep.subr.bf16.mxu0 0
        %358 = vmatpush1.bf16.msra.mxu0 0
        %359 = vmatprep.subr.bf16.mxu0 0
        %360 = vmatpush1.bf16.msra.mxu0 0
        %361 = vmatprep.subr.bf16.mxu0 0
        %362 = vmatpush1.bf16.msra.mxu0 0
        %363 = vmatprep.mubr.bf16.mxu0 0
        %364 = vmatmul.mubr.bf16.gmra.mrb[0].mxu0 %v304
        %v365 = vpop.f32.mrb[0].mxu0
        %v366 = vadd.f32 0.0, %v365
        %v367 = vpop.f32.mrb[0].mxu0
        %v368 = vpop.f32.mrb[0].mxu0
        %v369 = vadd.f32 0.0, %v368
        %v370 = vpop.f32.mrb[0].mxu0
        %371 = vmatprep.mubr.bf16.mxu0 0
        %372 = vmatmul.mubr.bf16.gmra.mrb[0].mxu0 %v307
        %v373 = vpop.f32.mrb[0].mxu0
        %v374 = vadd.f32 0.0, %v373
        %v375 = vpop.f32.mrb[0].mxu0
        %v376 = vpop.f32.mrb[0].mxu0
        %v377 = vadd.f32 0.0, %v376
        %v378 = vpop.f32.mrb[0].mxu0
        %379 = vmatprep.mubr.bf16.mxu0 0
        %380 = vmatmul.mubr.bf16.gmra.mrb[0].mxu0 %v310
        %v381 = vpop.f32.mrb[0].mxu0
        %v382 = vadd.f32 0.0, %v381
        %v383 = vpop.f32.mrb[0].mxu0
        %v384 = vpop.f32.mrb[0].mxu0
        %v385 = vadd.f32 0.0, %v384
        %v386 = vpop.f32.mrb[0].mxu0
        %387 = vmatprep.mubr.bf16.mxu0 0
        %388 = vmatmul.mubr.bf16.gmra.mrb[0].mxu0 %v313
        %v389 = vpop.f32.mrb[0].mxu0
        %v390 = vadd.f32 0.0, %v389
        %v391 = vpop.f32.mrb[0].mxu0
        %v392 = vpop.f32.mrb[0].mxu0
        %v393 = vadd.f32 0.0, %v392
        %v394 = vpop.f32.mrb[0].mxu0
        %395 = vmatprep.mubr.bf16.mxu0 0
        %396 = vmatmul.mubr.bf16.gmra.mrb[0].mxu0 %v316
        %v397 = vpop.f32.mrb[0].mxu0
        %v398 = vadd.f32 0.0, %v397
        %v399 = vpop.f32.mrb[0].mxu0
        %v400 = vpop.f32.mrb[0].mxu0
        %v401 = vadd.f32 0.0, %v400
        %v402 = vpop.f32.mrb[0].mxu0
        %403 = vmatprep.mubr.bf16.mxu0 0
        %404 = vmatmul.mubr.bf16.gmra.mrb[0].mxu0 %v319
        %v405 = vpop.f32.mrb[0].mxu0
        %v406 = vadd.f32 0.0, %v405
        %v407 = vpop.f32.mrb[0].mxu0
        %v408 = vpop.f32.mrb[0].mxu0
        %v409 = vadd.f32 0.0, %v408
        %v410 = vpop.f32.mrb[0].mxu0
        %411 = vmatprep.mubr.bf16.mxu0 0
        %412 = vmatmul.mubr.bf16.gmra.mrb[0].mxu0 %v322
        %v413 = vpop.f32.mrb[0].mxu0
        %v414 = vadd.f32 0.0, %v413
        %v415 = vpop.f32.mrb[0].mxu0
        %v416 = vpop.f32.mrb[0].mxu0
        %v417 = vadd.f32 0.0, %v416
        %v418 = vpop.f32.mrb[0].mxu0
        %419 = vmatprep.mubr.bf16.mxu0 0
        %420 = vmatmul.mubr.bf16.gmra.mrb[0].mxu0 %v325
        %v421 = vpop.f32.mrb[0].mxu0
        %v422 = vadd.f32 0.0, %v421
        %v423 = vpop.f32.mrb[0].mxu0
        %v424 = vpop.f32.mrb[0].mxu0
        %v425 = vadd.f32 0.0, %v424
        %v426 = vpop.f32.mrb[0].mxu0
        %427 = vdwg.mxu0
        %v428 = vld [vmem:[%s2] sm:$0x1]
        %v430 = vlaneseq
        %v431 = vshrl.u32 %v430, 7
        %v432 = vsub.s32 0, %v431
        %v433 = vrot.slane %v428, %v432
        %v435 = vmul.f32 %v366, %v433
        %v436 = vmul.f32 %v369, %v433
        %v437 = vmul.f32 %v374, %v433
        %v438 = vmul.f32 %v377, %v433
        %v439 = vmul.f32 %v382, %v433
        %v440 = vmul.f32 %v385, %v433
        %v441 = vmul.f32 %v390, %v433
        %v442 = vmul.f32 %v393, %v433
        %v443 = vmul.f32 %v398, %v433
        %v444 = vmul.f32 %v401, %v433
        %v445 = vmul.f32 %v406, %v433
        %v446 = vmul.f32 %v409, %v433
        %v447 = vmul.f32 %v414, %v433
        %v448 = vmul.f32 %v417, %v433
        %v449 = vmul.f32 %v422, %v433
        %v450 = vmul.f32 %v425, %v433
        %v451 = vld [vmem:[%s3] sm:$0x1]
        %v453 = vlaneseq
        %v454 = vshrl.u32 %v453, 7
        %v455 = vsub.s32 0, %v454
        %v456 = vrot.slane %v451, %v455
        %v458 = vadd.f32 %v435, %v456
        %v459 = vadd.f32 %v436, %v456
        %v460 = vadd.f32 %v437, %v456
        %v461 = vadd.f32 %v438, %v456
        %v462 = vadd.f32 %v439, %v456
        %v463 = vadd.f32 %v440, %v456
        %v464 = vadd.f32 %v441, %v456
        %v465 = vadd.f32 %v442, %v456
        %v466 = vadd.f32 %v443, %v456
        %v467 = vadd.f32 %v444, %v456
        %v468 = vadd.f32 %v445, %v456
        %v469 = vadd.f32 %v446, %v456
        %v470 = vadd.f32 %v447, %v456
        %v471 = vadd.f32 %v448, %v456
        %v472 = vadd.f32 %v449, %v456
        %v473 = vadd.f32 %v450, %v456
        %v474 = vmax.f32 %v458, 0.0
        %v475 = vmax.f32 %v459, 0.0
        %v476 = vmax.f32 %v460, 0.0
        %v477 = vmax.f32 %v461, 0.0
        %v478 = vmax.f32 %v462, 0.0
        %v479 = vmax.f32 %v463, 0.0
        %v480 = vmax.f32 %v464, 0.0
        %v481 = vmax.f32 %v465, 0.0
        %v482 = vmax.f32 %v466, 0.0
        %v483 = vmax.f32 %v467, 0.0
        %v484 = vmax.f32 %v468, 0.0
        %v485 = vmax.f32 %v469, 0.0
        %v486 = vmax.f32 %v470, 0.0
        %v487 = vmax.f32 %v471, 0.0
        %v488 = vmax.f32 %v472, 0.0
        %v489 = vmax.f32 %v473, 0.0
        %v490 = vmax.f32 %v474, %v478
        %v491 = vmax.f32 %v475, %v479
        %v492 = vmax.f32 %v476, %v480
        %v493 = vmax.f32 %v477, %v481
        %v494 = vmax.f32 %v482, %v486
        %v495 = vmax.f32 %v483, %v487
        %v496 = vmax.f32 %v484, %v488
        %v497 = vmax.f32 %v485, %v489
        %v498 = vmax.f32 %v490, %v494
        %v499 = vmax.f32 %v491, %v495
        %v500 = vmax.f32 %v492, %v496
        %v501 = vmax.f32 %v493, %v497
        %502 = vst [vmem:[%s214] sm:$0xff] %v498
        %503 = vst [vmem:[%s214 + $0x8] sm:$0xff] %v499
        %504 = vst [vmem:[%s214 + $0x10] sm:$0xff] %v500
        %505 = vst [vmem:[%s214 + $0x18] sm:$0xff] %v501
        %s506 = sand.u32 %s131, 1
        %s507 = scalar_lea.sflag [#allocation3], %s506
        %s508 = sand.u32 %s131, 1
        %s509 = smul.addr %s508, 32
        %s510 = scalar_lea.vmem [#allocation2], %s509
        // Predicated region
        $region37: #{tpu_custom_call.1} parent=35 // pred_check
          %p511 = pneg %p141
        $region38: #{tpu_custom_call.1} parent=35 // pred_check_branch
          %513 = sbr.rel (%p511) target = $region40
        $region39: #{tpu_custom_call.1} parent=35 // pred_region
          %s514 = smul.u32 4, %s23
          %s516 = ssub.s32 512, 512
          %517 = vsyncadd %s507, %s516
          %s518 = smul.addr %s22, 8
          %s519 = sadd.s32 %s514, %s518
          %s520 = smul.addr %s519, 128
          %s521 = scalar_lea.hbm %s4, %s520
          %s522 = sshll.u32 %s510, 4
          %s523 = int_to_ptr.vmem [resolvable:$true] %s522
          %528 = dma.vmem_to_hbm [thread:$0]  %s523, 512, %s521, %s507, 128, 128, 8
        $region40: #{tpu_custom_call.1} parent=35 // pred_fallthru
          _
      $region36: #{tpu_custom_call.1} parent=5 // pred_fallthru
        _
      %p529 = scmp.le.s32.totalorder 2, %s13
      // Predicated region
      $region41: #{tpu_custom_call.1} parent=5 // pred_check
        %p530 = pneg %p529
      $region42: #{tpu_custom_call.1} parent=5 // pred_check_branch
        %532 = sbr.rel (%p530) target = $region44
      $region43: #{tpu_custom_call.1} parent=5 // pred_region
        %s533 = ssub.s32 %s13, 2
        // Predicated region
        $region45: #{tpu_custom_call.1} parent=43 // pred_check
          %p534 = pneg %p147
        $region46: #{tpu_custom_call.1} parent=43 // pred_check_branch
          %536 = sbr.rel (%p534) target = $region48
        $region47: #{tpu_custom_call.1} parent=43 // pred_region
          %s537 = sand.u32 %s132, 1
          %s538 = scalar_lea.sflag [#allocation3], %s537
          %s539 = sand.u32 %s132, 1
          %s540 = smul.addr %s539, 32
          %s541 = scalar_lea.vmem [#allocation2], %s540
          %542 = dma.done %s538, 512
        $region48: #{tpu_custom_call.1} parent=43 // pred_fallthru
          _
      $region44: #{tpu_custom_call.1} parent=5 // pred_fallthru
        _
    $region6: #{tpu_custom_call.1} parent=1 // loop_footer
      %s17 = sadd.s32 1, %s13
    $region7: #{tpu_custom_call.1} parent=1 // loop_footer_branch
      %12 = sbr.rel target = $region3
    $region8: #{tpu_custom_call.1} parent=1 // loop_exit
      _
    %543 = vsyncpa [#allocation3], 1
    %s544 = scalar_lea.sflag [#allocation3], 1
    %545 = vsyncpa %s544, 1

// kernel: tpu_custom_call.1
$region0: #{tpu_custom_call.1}
  #allocation0 [shape = 'u32[]', space=smem, size = 0x4, offset = 0x4, fixed_abs, tag = 'smem constant byte address 0x4 - core index']
  #allocation1 [shape = 'u32[144,128]{1,0:T(1,128)}', space=vmem, size = 0x12000, scoped, tag = 'internal scratch']
  %s0 = inlined_call_operand.vmem [shape: bf16[2,2,128,40], index: 0, kind: input, shape index: {}]
  %s1 = inlined_call_operand.vmem [shape: bf16[40,128], index: 1, kind: input, shape index: {}]
  %s2 = inlined_call_operand.vmem [shape: f32[1,128], index: 2, kind: input, shape index: {}]
  %s3 = inlined_call_operand.vmem [shape: f32[1,128], index: 3, kind: input, shape index: {}]
  %s4 = inlined_call_operand.hbm [shape: f32[2,64,128], index: 4, kind: output, shape index: {}]
  %s5 = sld [smem:[#allocation0]]
  $region49: #{tpu_custom_call.1} parent=0
    _
  %s7 = ssub.s32 1, %s5
  %s8 = scalar_select 0, %s7, %s5
  $region1: #{tpu_custom_call.1} parent=0
    #allocation2 [shape = 'u8[32768]{0}', space=vmem, size = 0x8000, scoped, tag = 'output window, operand 0']
    #allocation3 [shape = 's32[2]{0}', space=sflag, size = 0x8, scoped, tag = 'scoped memory for tpu_custom_call.1']
    %9 = vsyncpa [#allocation3], 0
    %s10 = scalar_lea.sflag [#allocation3], 1
    %11 = vsyncpa %s10, 0
    loop: start=0, step=1, limit=6
    $region2: #{tpu_custom_call.1} parent=1 // loop_pre_header
      _
    $region3: #{tpu_custom_call.1} parent=1 // loop_header
      %s13 = sphi 0, %s17
      %p14 = scmp.ge.s32.totalorder %s13, 6
      %s20 = sphi 0, %s32
      %s21 = sphi 0, %s28
      %s22 = sphi 0, %s20
      %s23 = sphi 0, %s21
      %s24 = sphi 0, %s22
      %s25 = sphi 0, %s23
      %s37 = sphi 0, %s39
      %s40 = sphi 0, %s37
      %s41 = sphi 0, %s40
      %s57 = sphi 0, %s41
      %s61 = sphi 0, %s61
      %s63 = sphi 0, %s61
      %s64 = sphi 0, %s63
      %s78 = sphi 0, %s64
      %s82 = sphi 0, %s82
      %s84 = sphi 0, %s82
      %s85 = sphi 0, %s84
      %s99 = sphi 0, %s85
      %s103 = sphi 0, %s103
      %s105 = sphi 0, %s103
      %s106 = sphi 0, %s105
      %s120 = sphi 0, %s106
      %s128 = sphi 0, %s130
      %s131 = sphi 0, %s128
      %s132 = sphi 0, %s131
      %s148 = sphi 0, %s132
    $region4: #{tpu_custom_call.1} parent=1 // loop_header_branch
      %16 = sbr.rel (%p14) target = $region8
    $region5: #{tpu_custom_call.1} parent=1 // loop_body
      %s18 = ssub.s32 %s13, 1
      %s19 = ssub.s32 %s13, 2
      %s26 = sadd.s32 1, %s21
      %p27 = scmp.ge.s32.totalorder %s26, 2
      %s28 = scalar_select %p27, 0, %s26
      %s29 = sadd.s32 1, %s20
      %s30 = scalar_select %p27, %s29, %s20
      %p31 = scmp.ge.s32.totalorder %s30, 2
      %s32 = scalar_select %p31, 0, %s30
      %s33 = ssub.s32 %s20, %s32
      %s34 = ssub.s32 %s21, %s28
      %s35 = sor.u32 %s33, %s34
      %p36 = scmp.eq.s32.totalorder %s35, 0
      %s38 = sadd.s32 %s37, 1
      %s39 = scalar_select %p36, %s37, %s38
      %p42 = pneg %p36
      %p43 = scmp.eq.s32.totalorder %s13, 3
      %p44 = por %p42, %p43
      %p45 = scmp.ne.s32.totalorder %s37, %s40
      %p46 = scmp.eq.s32.totalorder %s13, 0
      %p47 = por %p45, %p46
      %p48 = scmp.ne.s32.totalorder %s37, %s40
      %p49 = scmp.eq.s32.totalorder %s18, 3
      %p50 = por %p48, %p49
      %p51 = scmp.ne.s32.totalorder %s40, %s41
      %p52 = scmp.eq.s32.totalorder %s18, 0
      %p53 = por %p51, %p52
      %p54 = scmp.ne.s32.totalorder %s40, %s41
      %p55 = scmp.eq.s32.totalorder %s19, 3
      %p56 = por %p54, %p55
      %p58 = scmp.ne.s32.totalorder %s41, %s57
      %p59 = scmp.eq.s32.totalorder %s19, 0
      %p60 = por %p58, %p59
      %s62 = sadd.s32 %s61, 1
      %p65 = scmp.eq.s32.totalorder %s13, 3
      %p66 = scmp.ne.s32.totalorder %s61, %s63
      %p67 = scmp.eq.s32.totalorder %s13, 0
      %p68 = por %p66, %p67
      %p69 = scmp.ne.s32.totalorder %s61, %s63
      %p70 = scmp.eq.s32.totalorder %s18, 3
      %p71 = por %p69, %p70
      %p72 = scmp.ne.s32.totalorder %s63, %s64
      %p73 = scmp.eq.s32.totalorder %s18, 0
      %p74 = por %p72, %p73
      %p75 = scmp.ne.s32.totalorder %s63, %s64
      %p76 = scmp.eq.s32.totalorder %s19, 3
      %p77 = por %p75, %p76
      %p79 = scmp.ne.s32.totalorder %s64, %s78
      %p80 = scmp.eq.s32.totalorder %s19, 0
      %p81 = por %p79, %p80
      %s83 = sadd.s32 %s82, 1
      %p86 = scmp.eq.s32.totalorder %s13, 3
      %p87 = scmp.ne.s32.totalorder %s82, %s84
      %p88 = scmp.eq.s32.totalorder %s13, 0
      %p89 = por %p87, %p88
      %p90 = scmp.ne.s32.totalorder %s82, %s84
      %p91 = scmp.eq.s32.totalorder %s18, 3
      %p92 = por %p90, %p91
      %p93 = scmp.ne.s32.totalorder %s84, %s85
      %p94 = scmp.eq.s32.totalorder %s18, 0
      %p95 = por %p93, %p94
      %p96 = scmp.ne.s32.totalorder %s84, %s85
      %p97 = scmp.eq.s32.totalorder %s19, 3
      %p98 = por %p96, %p97
      %p100 = scmp.ne.s32.totalorder %s85, %s99
      %p101 = scmp.eq.s32.totalorder %s19, 0
      %p102 = por %p100, %p101
      %s104 = sadd.s32 %s103, 1
      %p107 = scmp.eq.s32.totalorder %s13, 3
      %p108 = scmp.ne.s32.totalorder %s103, %s105
      %p109 = scmp.eq.s32.totalorder %s13, 0
      %p110 = por %p108, %p109
      %p111 = scmp.ne.s32.totalorder %s103, %s105
      %p112 = scmp.eq.s32.totalorder %s18, 3
      %p113 = por %p111, %p112
      %p114 = scmp.ne.s32.totalorder %s105, %s106
      %p115 = scmp.eq.s32.totalorder %s18, 0
      %p116 = por %p114, %p115
      %p117 = scmp.ne.s32.totalorder %s105, %s106
      %p118 = scmp.eq.s32.totalorder %s19, 3
      %p119 = por %p117, %p118
      %p121 = scmp.ne.s32.totalorder %s106, %s120
      %p122 = scmp.eq.s32.totalorder %s19, 0
      %p123 = por %p121, %p122
      %s124 = ssub.s32 %s20, %s32
      %s125 = ssub.s32 %s21, %s28
      %s126 = sor.u32 %s124, %s125
      %p127 = scmp.eq.s32.totalorder %s126, 0
      %s129 = sadd.s32 %s128, 1
      %s130 = scalar_select %p127, %s128, %s129
      %p133 = pneg %p127
      %p134 = scmp.eq.s32.totalorder %s13, 3
      %p135 = por %p133, %p134
      %p136 = scmp.ne.s32.totalorder %s128, %s131
      %p137 = scmp.eq.s32.totalorder %s13, 0
      %p138 = por %p136, %p137
      %p139 = scmp.ne.s32.totalorder %s128, %s131
      %p140 = scmp.eq.s32.totalorder %s18, 3
      %p141 = por %p139, %p140
      %p142 = scmp.ne.s32.totalorder %s131, %s132
      %p143 = scmp.eq.s32.totalorder %s18, 0
      %p144 = por %p142, %p143
      %p145 = scmp.ne.s32.totalorder %s131, %s132
      %p146 = scmp.eq.s32.totalorder %s19, 3
      %p147 = por %p145, %p146
      %p149 = scmp.ne.s32.totalorder %s132, %s148
      %p150 = scmp.eq.s32.totalorder %s19, 0
      %p151 = por %p149, %p150
      %p152 = scmp.le.s32.totalorder 1, %s13
      %p153 = scmp.lt.s32.totalorder %s13, 5
      %p154 = pnand %p152, %p153
      %p155 = pneg %p154
      // Predicated region
      $region9: #{tpu_custom_call.1} parent=5 // pred_check
        _
      $region10: #{tpu_custom_call.1} parent=5 // pred_check_branch
        %157 = sbr.rel (%p154) target = $region12
      $region11: #{tpu_custom_call.1} parent=5 // pred_region
        %s158 = ssub.s32 %s13, 1
        // Predicated region
        $region13: #{tpu_custom_call.1} parent=11 // pred_check
          %p159 = pneg %p74
        $region14: #{tpu_custom_call.1} parent=11 // pred_check_branch
          %161 = sbr.rel (%p159) target = $region16
        $region15: #{tpu_custom_call.1} parent=11 // pred_region
          _
        $region16: #{tpu_custom_call.1} parent=11 // pred_fallthru
          _
        // Predicated region
        $region17: #{tpu_custom_call.1} parent=11 // pred_check
          %p162 = pneg %p95
        $region18: #{tpu_custom_call.1} parent=11 // pred_check_branch
          %164 = sbr.rel (%p162) target = $region20
        $region19: #{tpu_custom_call.1} parent=11 // pred_region
          _
        $region20: #{tpu_custom_call.1} parent=11 // pred_fallthru
          _
        // Predicated region
        $region21: #{tpu_custom_call.1} parent=11 // pred_check
          %p165 = pneg %p116
        $region22: #{tpu_custom_call.1} parent=11 // pred_check_branch
          %167 = sbr.rel (%p165) target = $region24
        $region23: #{tpu_custom_call.1} parent=11 // pred_region
          _
        $region24: #{tpu_custom_call.1} parent=11 // pred_fallthru
          _
      $region12: #{tpu_custom_call.1} parent=5 // pred_fallthru
        _
      %p168 = scmp.lt.s32.totalorder %s13, 4
      // Predicated region
      $region25: #{tpu_custom_call.1} parent=5 // pred_check
        %p169 = pneg %p168
      $region26: #{tpu_custom_call.1} parent=5 // pred_check_branch
        %171 = sbr.rel (%p169) target = $region28
      $region27: #{tpu_custom_call.1} parent=5 // pred_region
        // Predicated region
        $region29: #{tpu_custom_call.1} parent=27 // pred_check
          %p172 = pneg %p47
        $region30: #{tpu_custom_call.1} parent=27 // pred_check_branch
          %174 = sbr.rel (%p172) target = $region32
        $region31: #{tpu_custom_call.1} parent=27 // pred_region
          %p175 = scmp.lt.s32.totalorder %s20, 1
          %s176 = scalar_select %p175, %s20, 1
          %p177 = scmp.lt.s32.totalorder %s21, 1
          %s178 = scalar_select %p177, %s21, 1
          %s179 = smul.addr %s178, 16
          %s180 = smul.addr %s176, 32
          %s181 = sadd.s32 %s179, %s180
          %s182 = smul.addr %s181, 4
          %s183 = scalar_lea.vmem %s0, %s182
        $region32: #{tpu_custom_call.1} parent=27 // pred_fallthru
          _
      $region28: #{tpu_custom_call.1} parent=5 // pred_fallthru
        _
      %p184 = scmp.le.s32.totalorder 1, %s13
      %p185 = scmp.lt.s32.totalorder %s13, 5
      %p186 = pnand %p184, %p185
      %p187 = pneg %p186
      // Predicated region
      $region33: #{tpu_custom_call.1} parent=5 // pred_check
        _
      $region34: #{tpu_custom_call.1} parent=5 // pred_check_branch
        %189 = sbr.rel (%p186) target = $region36
      $region35: #{tpu_custom_call.1} parent=5 // pred_region
        %s190 = ssub.s32 %s13, 1
        %p191 = scmp.lt.s32.totalorder %s22, 1
        %s192 = scalar_select %p191, %s22, 1
        %p193 = scmp.lt.s32.totalorder %s23, 1
        %s194 = scalar_select %p193, %s23, 1
        %s195 = smul.addr %s194, 16
        %s196 = smul.addr %s192, 32
        %s197 = sadd.s32 %s195, %s196
        %s198 = smul.addr %s197, 4
        %s199 = scalar_lea.vmem %s0, %s198
        %p200 = pneg %p53
        %p201 = pneg %p50
        %p202 = pneg %p74
        %p203 = pneg %p71
        %p204 = pneg %p95
        %p205 = pneg %p92
        %p206 = pneg %p116
        %p207 = pneg %p113
        %p208 = pneg %p144
        %p209 = pneg %p141
        %s210 = sand.u32 %s131, 1
        %s211 = scalar_lea.sflag [#allocation3], %s210
        %s212 = sand.u32 %s131, 1
        %s213 = smul.addr %s212, 32
        %s214 = scalar_lea.vmem [#allocation2], %s213
        %p215 = scmp.lt.s32.totalorder %s22, 1
        %s216 = scalar_select %p215, %s22, 1
        %p217 = scmp.lt.s32.totalorder %s23, 1
        %s218 = scalar_select %p217, %s23, 1
        %s219 = smul.addr %s218, 16
        %s220 = smul.addr %s216, 32
        %s221 = sadd.s32 %s219, %s220
        %s222 = smul.addr %s221, 4
        %s223 = scalar_lea.vmem %s0, %s222
        %s224 = smul.u32 4, %s23
        %v226 = vld [vmem:[%s223] sm:$0xf]
        %v227 = vld [vmem:[%s223 + $0x4] sm:$0xf]
        %v228 = vld [vmem:[%s223 + $0x8] sm:$0xf]
        %v229 = vld [vmem:[%s223 + $0xc] sm:$0xf]
        %v230 = vld [vmem:[%s223 + $0x10] sm:$0xf]
        %v231 = vld [vmem:[%s223 + $0x14] sm:$0xf]
        %v232 = vld [vmem:[%s223 + $0x18] sm:$0xf]
        %v233 = vld [vmem:[%s223 + $0x1c] sm:$0xf]
        %v234 = vld [vmem:[%s223 + $0x20] sm:$0xf]
        %v235 = vld [vmem:[%s223 + $0x24] sm:$0xf]
        %v236 = vld [vmem:[%s223 + $0x28] sm:$0xf]
        %v237 = vld [vmem:[%s223 + $0x2c] sm:$0xf]
        %v238 = vld [vmem:[%s223 + $0x30] sm:$0xf]
        %v239 = vld [vmem:[%s223 + $0x34] sm:$0xf]
        %v240 = vld [vmem:[%s223 + $0x38] sm:$0xf]
        %v241 = vld [vmem:[%s223 + $0x3c] sm:$0xf]
        %v242 = vld [vmem:[%s1] sm:$0xf]
        %v243 = vld [vmem:[%s1 + $0x4] sm:$0xf]
        %v244 = vld [vmem:[%s1 + $0x8] sm:$0xf]
        %v245 = vld [vmem:[%s1 + $0xc] sm:$0xf]
        %v246 = vld [vmem:[%s1 + $0x10] sm:$0xf]
        %v263 = vunpack.c.l.b16 %v226
        %v264 = vunpack.c.l.b16 %v227
        %v265 = vunpack.c.l.b16 %v228
        %v266 = vunpack.c.l.b16 %v229
        %v267 = vunpack.c.l.b16 %v230
        %v268 = vunpack.c.l.b16 %v231
        %v269 = vunpack.c.l.b16 %v232
        %v270 = vunpack.c.l.b16 %v233
        %v271 = vunpack.c.l.b16 %v234
        %v272 = vunpack.c.l.b16 %v235
        %v273 = vunpack.c.l.b16 %v236
        %v274 = vunpack.c.l.b16 %v237
        %v275 = vunpack.c.l.b16 %v238
        %v276 = vunpack.c.l.b16 %v239
        %v277 = vunpack.c.l.b16 %v240
        %v278 = vunpack.c.l.b16 %v241
        %v279 = vpack.c.b16 %v264, %v263
        %v280 = vpack.c.b16 %v266, %v265
        %v281 = vpack.c.b16 %v268, %v267
        %v282 = vpack.c.b16 %v270, %v269
        %v283 = vpack.c.b16 %v272, %v271
        %v284 = vpack.c.b16 %v274, %v273
        %v285 = vpack.c.b16 %v276, %v275
        %v286 = vpack.c.b16 %v278, %v277
        %v292 = vunpack.c.l.b16 %v242
        %v293 = vunpack.c.l.b16 %v243
        %v294 = vunpack.c.l.b16 %v244
        %v295 = vunpack.c.l.b16 %v245
        %v296 = vunpack.c.l.b16 %v246
        %v297 = vpack.c.b16 %v293, %v292
        %v298 = vpack.c.b16 %v295, %v294
        %v299 = vpack.c.b16 %v296, %v296
        %vm302 = vcmask 326656
        %v304 = vsel %vm302, %v279, 0
        %v307 = vsel %vm302, %v280, 0
        %v310 = vsel %vm302, %v281, 0
        %v313 = vsel %vm302, %v282, 0
        %v316 = vsel %vm302, %v283, 0
        %v319 = vsel %vm302, %v284, 0
        %v322 = vsel %vm302, %v285, 0
        %v325 = vsel %vm302, %v286, 0
        %vm327 = vcmask 1043456
        %v329 = vsel %vm327, %v299, 0
        %331 = vmatprep.subr.bf16.mxu0 0
        %332 = vmatpush1.bf16.msra.mxu0 %v297
        %333 = vmatprep.subr.bf16.mxu0 0
        %334 = vmatpush1.bf16.msra.mxu0 %v298
        %335 = vmatprep.subr.bf16.mxu0 0
        %336 = vmatpush1.bf16.msra.mxu0 %v329
        %337 = vmatprep.subr.bf16.mxu0 0
        %338 = vmatpush1.bf16.msra.mxu0 0
        %339 = vmatprep.subr.bf16.mxu0 0
        %340 = vmatpush1.bf16.msra.mxu0 0
        %341 = vmatprep.subr.bf16.mxu0 0
        %342 = vmatpush1.bf16.msra.mxu0 0
        %343 = vmatprep.subr.bf16.mxu0 0
        %344 = vmatpush1.bf16.msra.mxu0 0
        %345 = vmatprep.subr.bf16.mxu0 0
        %346 = vmatpush1.bf16.msra.mxu0 0
        %347 = vmatprep.subr.bf16.mxu0 0
        %348 = vmatpush1.bf16.msra.mxu0 0
        %349 = vmatprep.subr.bf16.mxu0 0
        %350 = vmatpush1.bf16.msra.mxu0 0
        %351 = vmatprep.subr.bf16.mxu0 0
        %352 = vmatpush1.bf16.msra.mxu0 0
        %353 = vmatprep.subr.bf16.mxu0 0
        %354 = vmatpush1.bf16.msra.mxu0 0
        %355 = vmatprep.subr.bf16.mxu0 0
        %356 = vmatpush1.bf16.msra.mxu0 0
        %357 = vmatprep.subr.bf16.mxu0 0
        %358 = vmatpush1.bf16.msra.mxu0 0
        %359 = vmatprep.subr.bf16.mxu0 0
        %360 = vmatpush1.bf16.msra.mxu0 0
        %361 = vmatprep.subr.bf16.mxu0 0
        %362 = vmatpush1.bf16.msra.mxu0 0
        %363 = vmatprep.mubr.bf16.mxu0 0
        %364 = vmatmul.mubr.bf16.gmra.mrb[0].mxu0 %v304
        %v365 = vpop.f32.mrb[0].mxu0
        %v366 = vadd.f32 0.0, %v365
        %v367 = vpop.f32.mrb[0].mxu0
        %v368 = vpop.f32.mrb[0].mxu0
        %v369 = vadd.f32 0.0, %v368
        %v370 = vpop.f32.mrb[0].mxu0
        %371 = vmatprep.mubr.bf16.mxu0 0
        %372 = vmatmul.mubr.bf16.gmra.mrb[0].mxu0 %v307
        %v373 = vpop.f32.mrb[0].mxu0
        %v374 = vadd.f32 0.0, %v373
        %v375 = vpop.f32.mrb[0].mxu0
        %v376 = vpop.f32.mrb[0].mxu0
        %v377 = vadd.f32 0.0, %v376
        %v378 = vpop.f32.mrb[0].mxu0
        %379 = vmatprep.mubr.bf16.mxu0 0
        %380 = vmatmul.mubr.bf16.gmra.mrb[0].mxu0 %v310
        %v381 = vpop.f32.mrb[0].mxu0
        %v382 = vadd.f32 0.0, %v381
        %v383 = vpop.f32.mrb[0].mxu0
        %v384 = vpop.f32.mrb[0].mxu0
        %v385 = vadd.f32 0.0, %v384
        %v386 = vpop.f32.mrb[0].mxu0
        %387 = vmatprep.mubr.bf16.mxu0 0
        %388 = vmatmul.mubr.bf16.gmra.mrb[0].mxu0 %v313
        %v389 = vpop.f32.mrb[0].mxu0
        %v390 = vadd.f32 0.0, %v389
        %v391 = vpop.f32.mrb[0].mxu0
        %v392 = vpop.f32.mrb[0].mxu0
        %v393 = vadd.f32 0.0, %v392
        %v394 = vpop.f32.mrb[0].mxu0
        %395 = vmatprep.mubr.bf16.mxu0 0
        %396 = vmatmul.mubr.bf16.gmra.mrb[0].mxu0 %v316
        %v397 = vpop.f32.mrb[0].mxu0
        %v398 = vadd.f32 0.0, %v397
        %v399 = vpop.f32.mrb[0].mxu0
        %v400 = vpop.f32.mrb[0].mxu0
        %v401 = vadd.f32 0.0, %v400
        %v402 = vpop.f32.mrb[0].mxu0
        %403 = vmatprep.mubr.bf16.mxu0 0
        %404 = vmatmul.mubr.bf16.gmra.mrb[0].mxu0 %v319
        %v405 = vpop.f32.mrb[0].mxu0
        %v406 = vadd.f32 0.0, %v405
        %v407 = vpop.f32.mrb[0].mxu0
        %v408 = vpop.f32.mrb[0].mxu0
        %v409 = vadd.f32 0.0, %v408
        %v410 = vpop.f32.mrb[0].mxu0
        %411 = vmatprep.mubr.bf16.mxu0 0
        %412 = vmatmul.mubr.bf16.gmra.mrb[0].mxu0 %v322
        %v413 = vpop.f32.mrb[0].mxu0
        %v414 = vadd.f32 0.0, %v413
        %v415 = vpop.f32.mrb[0].mxu0
        %v416 = vpop.f32.mrb[0].mxu0
        %v417 = vadd.f32 0.0, %v416
        %v418 = vpop.f32.mrb[0].mxu0
        %419 = vmatprep.mubr.bf16.mxu0 0
        %420 = vmatmul.mubr.bf16.gmra.mrb[0].mxu0 %v325
        %v421 = vpop.f32.mrb[0].mxu0
        %v422 = vadd.f32 0.0, %v421
        %v423 = vpop.f32.mrb[0].mxu0
        %v424 = vpop.f32.mrb[0].mxu0
        %v425 = vadd.f32 0.0, %v424
        %v426 = vpop.f32.mrb[0].mxu0
        %427 = vdwg.mxu0
        %v428 = vld [vmem:[%s2] sm:$0x1]
        %v430 = vlaneseq
        %v431 = vshrl.u32 %v430, 7
        %v432 = vsub.s32 0, %v431
        %v433 = vrot.slane %v428, %v432
        %v435 = vmul.f32 %v366, %v433
        %v436 = vmul.f32 %v369, %v433
        %v437 = vmul.f32 %v374, %v433
        %v438 = vmul.f32 %v377, %v433
        %v439 = vmul.f32 %v382, %v433
        %v440 = vmul.f32 %v385, %v433
        %v441 = vmul.f32 %v390, %v433
        %v442 = vmul.f32 %v393, %v433
        %v443 = vmul.f32 %v398, %v433
        %v444 = vmul.f32 %v401, %v433
        %v445 = vmul.f32 %v406, %v433
        %v446 = vmul.f32 %v409, %v433
        %v447 = vmul.f32 %v414, %v433
        %v448 = vmul.f32 %v417, %v433
        %v449 = vmul.f32 %v422, %v433
        %v450 = vmul.f32 %v425, %v433
        %v451 = vld [vmem:[%s3] sm:$0x1]
        %v453 = vlaneseq
        %v454 = vshrl.u32 %v453, 7
        %v455 = vsub.s32 0, %v454
        %v456 = vrot.slane %v451, %v455
        %v458 = vadd.f32 %v435, %v456
        %v459 = vadd.f32 %v436, %v456
        %v460 = vadd.f32 %v437, %v456
        %v461 = vadd.f32 %v438, %v456
        %v462 = vadd.f32 %v439, %v456
        %v463 = vadd.f32 %v440, %v456
        %v464 = vadd.f32 %v441, %v456
        %v465 = vadd.f32 %v442, %v456
        %v466 = vadd.f32 %v443, %v456
        %v467 = vadd.f32 %v444, %v456
        %v468 = vadd.f32 %v445, %v456
        %v469 = vadd.f32 %v446, %v456
        %v470 = vadd.f32 %v447, %v456
        %v471 = vadd.f32 %v448, %v456
        %v472 = vadd.f32 %v449, %v456
        %v473 = vadd.f32 %v450, %v456
        %v474 = vmax.f32 %v458, 0.0
        %v475 = vmax.f32 %v459, 0.0
        %v476 = vmax.f32 %v460, 0.0
        %v477 = vmax.f32 %v461, 0.0
        %v478 = vmax.f32 %v462, 0.0
        %v479 = vmax.f32 %v463, 0.0
        %v480 = vmax.f32 %v464, 0.0
        %v481 = vmax.f32 %v465, 0.0
        %v482 = vmax.f32 %v466, 0.0
        %v483 = vmax.f32 %v467, 0.0
        %v484 = vmax.f32 %v468, 0.0
        %v485 = vmax.f32 %v469, 0.0
        %v486 = vmax.f32 %v470, 0.0
        %v487 = vmax.f32 %v471, 0.0
        %v488 = vmax.f32 %v472, 0.0
        %v489 = vmax.f32 %v473, 0.0
        %v490 = vmax.f32 %v474, %v478
        %v491 = vmax.f32 %v475, %v479
        %v492 = vmax.f32 %v476, %v480
        %v493 = vmax.f32 %v477, %v481
        %v494 = vmax.f32 %v482, %v486
        %v495 = vmax.f32 %v483, %v487
        %v496 = vmax.f32 %v484, %v488
        %v497 = vmax.f32 %v485, %v489
        %v498 = vmax.f32 %v490, %v494
        %v499 = vmax.f32 %v491, %v495
        %v500 = vmax.f32 %v492, %v496
        %v501 = vmax.f32 %v493, %v497
        %502 = vst [vmem:[%s214] sm:$0xff] %v498
        %503 = vst [vmem:[%s214 + $0x8] sm:$0xff] %v499
        %504 = vst [vmem:[%s214 + $0x10] sm:$0xff] %v500
        %505 = vst [vmem:[%s214 + $0x18] sm:$0xff] %v501
        %s506 = sand.u32 %s131, 1
        %s507 = scalar_lea.sflag [#allocation3], %s506
        %s508 = sand.u32 %s131, 1
        %s509 = smul.addr %s508, 32
        %s510 = scalar_lea.vmem [#allocation2], %s509
        // Predicated region
        $region37: #{tpu_custom_call.1} parent=35 // pred_check
          %p511 = pneg %p141
        $region38: #{tpu_custom_call.1} parent=35 // pred_check_branch
          %513 = sbr.rel (%p511) target = $region40
        $region39: #{tpu_custom_call.1} parent=35 // pred_region
          %s514 = smul.u32 4, %s23
          %s516 = ssub.s32 512, 512
          %517 = vsyncadd %s507, %s516
          %s518 = smul.addr %s22, 8
          %s519 = sadd.s32 %s514, %s518
          %s520 = smul.addr %s519, 128
          %s521 = scalar_lea.hbm %s4, %s520
          %s522 = sshll.u32 %s510, 4
          %s523 = int_to_ptr.vmem [resolvable:$true] %s522
          %528 = dma.vmem_to_hbm [thread:$0]  %s523, 512, %s521, %s507, 128, 128, 8
        $region40: #{tpu_custom_call.1} parent=35 // pred_fallthru
          _
      $region36: #{tpu_custom_call.1} parent=5 // pred_fallthru
        _
      %p529 = scmp.le.s32.totalorder 2, %s13
      // Predicated region
      $region41: #{tpu_custom_call.1} parent=5 // pred_check
        %p530 = pneg %p529
      $region42: #{tpu_custom_call.1} parent=5 // pred_check_branch
        %532 = sbr.rel (%p530) target = $region44
      $region43: #{tpu_custom_call.1} parent=5 // pred_region
        %s533 = ssub.s32 %s13, 2
        // Predicated region
        $region45: #{tpu_custom_call.1} parent=43 // pred_check
          %p534 = pneg %p147
        $region46: #{tpu_custom_call.1} parent=43 // pred_check_branch
          %536 = sbr.rel (%p534) target = $region48
        $region47: #{tpu_custom_call.1} parent=43 // pred_region
          %s537 = sand.u32 %s132, 1
          %s538 = scalar_lea.sflag [#allocation3], %s537
          %s539 = sand.u32 %s132, 1
          %s540 = smul.addr %s539, 32
          %s541 = scalar_lea.vmem [#allocation2], %s540
          %542 = dma.done %s538, 512
        $region48: #{tpu_custom_call.1} parent=43 // pred_fallthru
          _
      $region44: #{tpu_custom_call.1} parent=5 // pred_fallthru
        _
    $region6: #{tpu_custom_call.1} parent=1 // loop_footer
      %s17 = sadd.s32 1, %s13
    $region7: #{tpu_custom_call.1} parent=1 // loop_footer_branch
      %12 = sbr.rel target = $region3
    $region8: #{tpu_custom_call.1} parent=1 // loop_exit
      _
    %543 = vsyncpa [#allocation3], 1
    %s544 = scalar_lea.sflag [#allocation3], 1
    %545 = vsyncpa %s544, 1

</llo_original>
